<compile_context>
chip_gen: v6e
topology: v6e:2x2x1
jax: 0.10.0
libtpu: 0.0.40
codegen_flags: <defaults>
</compile_context>

<pallas_src>
import itertools
import math

import jax
import jax.numpy as jnp
from jax import lax
from jax.experimental import pallas as pl
from jax.experimental.pallas import tpu as pltpu


def _cdiv(a: int, b: int) -> int:
    return -(-a // b)


def _vmem_capacity_bytes() -> int:
    """Best-effort physical VMEM query; conservative (v7x-sized) fallback."""
    try:
        info = pltpu.get_tpu_info()
        cap = getattr(info, "vmem_capacity_bytes", None)
        if cap:
            return int(cap)
    except Exception:
        pass
    return 64 << 20


def _make_repeat_kernel(fold_reps, block_shape, itemsize,
                        widen_bytes_cap=2 << 20, max_unrolled_stores=256):
    """Kernel writing jnp.tile(x_block, fold_reps) into the output block.

    Returns (kernel, widen_k) where widen_k is the in-register lane-widening
    factor (for VMEM accounting in the wrapper).
    """
    nd = len(fold_reps)
    in_last = int(block_shape[-1])
    r_lane = int(fold_reps[-1])
    blk_bytes = max(1, math.prod(block_shape) * itemsize)
    lane_aligned = (in_last % 128 == 0)

    # Lane widening: only enough copies to reach a 128-aligned chunk width (so
    # subsequent stores are unmasked), capped in bytes to bound vreg pressure.
    if r_lane == 1 or lane_aligned:
        widen_k = 1
    else:
        k_align = 128 // math.gcd(in_last, 128)
        widen_k = max(1, min(r_lane, k_align, widen_bytes_cap // blk_bytes))

    chunk_w = in_last * widen_k
    q, rem = divmod(r_lane, widen_k)          # q full-chunk stores + 1 remainder
    store_reps = tuple(fold_reps[:-1])        # store counts for dims 0..nd-2
    n_major = math.prod(store_reps) if store_reps else 1
    n_stores = n_major * (q + (1 if rem else 0))

    def _lead_slices(idxs):
        sl = []
        for d in range(nd - 1):
            if store_reps[d] == 1:
                sl.append(slice(None))
            else:
                sl.append(pl.ds(idxs[d] * block_shape[d], block_shape[d]))
        return sl

    def kernel(x_ref, o_ref):
        v = x_ref[...]
        w = v if widen_k == 1 else jnp.concatenate([v] * widen_k, axis=-1)
        w_rem = None if rem == 0 else w[..., : rem * in_last]

        if n_stores == 1:
            o_ref[...] = w
            return

        if n_stores <= max_unrolled_stores:
            # Static offsets -> plain (mostly unmasked) vector stores of slabs.
            for idx in itertools.product(*[range(r) for r in store_reps]):
                sl = _lead_slices(idx)
                for t in range(q):
                    o_ref[tuple(sl + [pl.ds(t * chunk_w, chunk_w)])] = w
                if rem:
                    o_ref[tuple(sl + [pl.ds(q * chunk_w, rem * in_last)])] = w_rem
            return

        # Very large repeat counts: loop of slab stores keeps VMEM at ~1x block
        # (no concat-built full-block temporary) and bounds code size.
        counts = store_reps + (q,)
        n_flat = n_major * q

        def body(flat, carry):
            rsl = []
            rr = flat
            for c in reversed(counts):
                rsl.append(rr % c)
                rr = rr // c
            idxs = rsl[::-1]
            sl = _lead_slices(idxs[:-1])
            off = idxs[-1] * chunk_w
            if chunk_w % 128 == 0:
                off = pl.multiple_of(off, 128)
            o_ref[tuple(sl + [pl.ds(off, chunk_w)])] = w
            return carry

        lax.fori_loop(0, n_flat, body, 0)

        if rem:
            def body_rem(flat, carry):
                rsl = []
                rr = flat
                for c in reversed(store_reps):
                    rsl.append(rr % c)
                    rr = rr // c
                idxs = rsl[::-1]
                sl = _lead_slices(idxs)
                o_ref[tuple(sl + [pl.ds(q * chunk_w, rem * in_last)])] = w_rem
                return carry

            lax.fori_loop(0, n_major, body_rem, 0)

    return kernel, widen_k


def repeat_pallas(
    x: jax.Array,
    repeats,
    *,
    out_block_budget: int = None,
    in_block_budget: int = None,
    min_grid_steps: int = 4,
    split_threshold: int = 1 << 20,
) -> jax.Array:
    """Equivalent of PyTorch `x.repeat(*repeats)` (tile along each dim)."""
    repeats = tuple(int(r) for r in repeats)
    if len(repeats) < x.ndim:
        raise ValueError(
            "Number of dimensions of repeat dims can not be smaller than "
            "number of dimensions of tensor")
    nd = len(repeats)
    if nd == 0:
        return x

    # torch prepends singleton dims when len(repeats) > x.ndim.
    x = x.reshape((1,) * (nd - x.ndim) + x.shape)
    final_shape = tuple(s * r for s, r in zip(x.shape, repeats))

    # Empty result (a repeat of 0 or an empty input dim): no kernel needed.
    if any(d == 0 for d in final_shape):
        return jnp.zeros(final_shape, x.dtype)
    # Pure no-op repeat.
    if all(r == 1 for r in repeats):
        return x

    # Work in >= 2-D so the (sublane, lane) layout rules are easy to satisfy.
    if nd == 1:
        x = x.reshape((1,) + x.shape)
        repeats = (1,) + repeats
        nd = 2

    shape = x.shape
    itemsize = jnp.dtype(x.dtype).itemsize
    x_bytes = math.prod(shape) * itemsize
    out_total_bytes = x_bytes * math.prod(repeats)
    sublane = {4: 8, 2: 16, 1: 32}.get(itemsize, 32)

    # ---- per-generation block budgets -----------------------------------------
    vmem_cap = _vmem_capacity_bytes()
    small_vmem = vmem_cap <= (96 << 20)           # v7x: 64 MiB/TC; v5e/v6e: 128 MiB
    if out_block_budget is None:
        out_block_budget = (6 << 20) if small_vmem else (16 << 20)
    if in_block_budget is None:
        in_block_budget = (3 << 20) if small_vmem else (8 << 20)
    hard_cap = max((8 << 20) if small_vmem else (24 << 20), out_block_budget)
    vmem_limit_cap = (52 << 20) if small_vmem else (96 << 20)

    # ---- fold trailing repeat factors into one big, lane-dense output block ---
    n_fold = 0
    fold_mult = 1
    for i in range(nd - 1, -1, -1):
        new_bytes = x_bytes * fold_mult * repeats[i]
        limit = hard_cap if i == nd - 1 else out_block_budget
        if new_bytes <= limit:
            fold_mult *= repeats[i]
            n_fold += 1
        else:
            break

    # Keep at least one repeat axis on the grid when everything folded but the
    # output is large: enables megacore (v7x) and DMA writeback pipelining.
    if n_fold == nd and out_total_bytes > split_threshold:
        j = next(i for i in range(nd) if repeats[i] > 1)
        n_fold = nd - 1 - j

    # Correctness guards: a repeated dim landing on the block's lane/sublane
    # axis with a non-full, unaligned extent must be folded.
    if n_fold < 1 and repeats[-1] > 1 and shape[-1] % 128 != 0:
        n_fold = 1
    if n_fold < 2 and nd >= 2 and repeats[-2] > 1 and shape[-2] % sublane != 0:
        n_fold = 2
    # TODO(synk): a pathological huge-x + misaligned-dim combination could still
    # exceed the VMEM cap below; unreachable for typical shapes.

    n_lead = nd - n_fold
    fold_reps = (1,) * n_lead + repeats[n_lead:]

    # ---- tiling of the input along dim 0 (VMEM fit and/or pipeline split) -----
    lead_steps = math.prod(repeats[:n_lead]) if n_lead else 1
    tile0 = shape[0]
    if n_lead >= 1 and shape[0] > 1:
        want_tiles = 1
        if x_bytes > in_block_budget:
            want_tiles = max(want_tiles, _cdiv(x_bytes, in_block_budget))
        if lead_steps < min_grid_steps and out_total_bytes > split_threshold:
            want_tiles = max(want_tiles, _cdiv(min_grid_steps, lead_steps))
        if want_tiles > 1:
            target = max(1, shape[0] // want_tiles)
            for t in range(min(target, shape[0] - 1), 0, -1):
                if shape[0] % t:
                    continue
                if nd == 2 and t % sublane != 0:   # dim 0 is the sublane axis
                    continue
                tile0 = t
                break
    n_tiles0 = shape[0] // tile0
    has_tile_axis = n_tiles0 > 1
    # TODO(synk): extend tiling to dim 1 / non-divisor tiles for huge single-row
    # inputs on v7x (64 MiB VMEM); dim-0 divisor tiling covers typical shapes.

    # ---- grid / block specs ----------------------------------------------------
    in_block = (tile0,) + shape[1:]
    d0 = shape[0] * repeats[0] if n_lead == 0 else tile0
    out_block = ((d0,)
                 + tuple(shape[i] for i in range(1, n_lead))
                 + tuple(shape[i] * repeats[i] for i in range(max(n_lead, 1), nd)))

    if n_lead == 0:
        grid = (1,)
    else:
        # Tile axis OUTERMOST: input block index is constant across all inner
        # (repeat) steps, so Pallas elides re-fetching the input tile from HBM.
        grid = ((n_tiles0,) if has_tile_axis else ()) \
               + (repeats[0],) + tuple(repeats[1:n_lead])

    def in_map(*g):
        if n_lead == 0:
            return (0,) * nd
        idx0 = g[0] if has_tile_axis else 0
        return (idx0,) + (0,) * (nd - 1)

    def out_map(*g):
        if n_lead == 0:
            return (0,) * nd
        if has_tile_axis:
            tile_idx, rep0 = g[0], g[1]
            lead = tuple(g[2:2 + (n_lead - 1)])
        else:
            tile_idx, rep0 = 0, g[0]
            lead = tuple(g[1:1 + (n_lead - 1)])
        idx0 = rep0 * n_tiles0 + tile_idx
        return (idx0,) + lead + (0,) * n_fold

    kernel, widen_k = _make_repeat_kernel(fold_reps, in_block, itemsize)

    in_blk_bytes = math.prod(in_block) * itemsize
    out_blk_bytes = math.prod(out_block) * itemsize
    # Double-buffered in/out blocks + in-kernel temporaries (v and its widened
    # copy) + slack, capped below physical VMEM (tight on v7x).
    vmem_est = (2 * (in_blk_bytes + out_blk_bytes)
                + (widen_k + 1) * in_blk_bytes + (2 << 20))
    vmem_limit = int(min(max(vmem_est, 32 << 20), vmem_limit_cap))

    work_out_shape = tuple(s * r for s, r in zip(shape, repeats))
    cost = pl.CostEstimate(
        flops=0, transcendentals=0,
        bytes_accessed=x_bytes + math.prod(work_out_shape) * itemsize)

    out = pl.pallas_call(
        kernel,
        out_shape=jax.ShapeDtypeStruct(work_out_shape, x.dtype),
        grid=grid,
        in_specs=[pl.BlockSpec(in_block, in_map)],
        out_specs=pl.BlockSpec(out_block, out_map),
        compiler_params=pltpu.CompilerParams(
            dimension_semantics=("parallel",) * len(grid),
            vmem_limit_bytes=vmem_limit),
        cost_estimate=cost,
    )(x)
    return out.reshape(final_shape)


class Repeat:
    """Pallas/JAX counterpart of torchwrench.nn.modules.tensor.Repeat."""

    def __init__(self, *repeats: int) -> None:
        if len(repeats) == 1 and isinstance(repeats[0], (tuple, list)):
            repeats = tuple(repeats[0])
        self.repeats = tuple(int(r) for r in repeats)

    def __call__(self, x: jax.Array) -> jax.Array:
        return repeat_pallas(x, self.repeats)

    def extra_repr(self) -> str:
        return f"repeats={self.repeats}"


if __name__ == "__main__":
    key = jax.random.PRNGKey(0)
    k1, k2, k3, k4 = jax.random.split(key, 4)

    # Case 1: small input, more repeat dims than tensor dims (torch prepends 1s).
    # Folded output > 1 MiB -> leading repeat kept on the grid (3 parallel steps).
    x1 = jax.random.normal(k1, (2, 4, 8, 128), dtype=jnp.float32)
    reps1 = (3, 2, 1, 4, 2)
    out1 = jax.block_until_ready(Repeat(*reps1)(x1))
    ref1 = jnp.tile(x1, reps1)
    assert out1.shape == ref1.shape and out1.dtype == ref1.dtype
    assert bool(jnp.array_equal(out1, ref1))

    # Case 2: force the gridded + input-tiled path with tiny VMEM budgets.
    # Tile axis is outermost -> each input tile is fetched from HBM once.
    x2 = jax.random.normal(k2, (16, 8, 128), dtype=jnp.float32)
    reps2 = (2, 3, 2)
    out2 = jax.block_until_ready(
        repeat_pallas(x2, reps2,
                      out_block_budget=64 * 1024, in_block_budget=32 * 1024))
    ref2 = jnp.tile(x2, reps2)
    assert out2.shape == ref2.shape
    assert bool(jnp.array_equal(out2, ref2))

    # Case 3: zero repeat -> empty tensor (handled without a kernel launch).
    out3 = Repeat(0, 2)(jnp.ones((4, 8), jnp.float32))
    assert out3.shape == (0, 16)

    # Case 4: unaligned lane dim (96) -> capped in-register widening to a
    # 128-aligned chunk + remainder slab store.
    x4 = jax.random.normal(k3, (4, 96), dtype=jnp.float32)
    reps4 = (2, 5)
    out4 = jax.block_until_ready(Repeat(*reps4)(x4))
    ref4 = jnp.tile(x4, reps4)
    assert out4.shape == ref4.shape
    assert bool(jnp.array_equal(out4, ref4))

    # Case 5: very large trailing repeat count -> fori_loop slab-store fallback.
    x5 = jax.random.normal(k4, (1, 128), dtype=jnp.float32)
    reps5 = (1, 300)
    out5 = jax.block_until_ready(Repeat(*reps5)(x5))
    ref5 = jnp.tile(x5, reps5)
    assert out5.shape == ref5.shape
    assert bool(jnp.array_equal(out5, ref5))

    print("KERNEL_OK")
</pallas_src>

<mosaic_0001>
module attributes {stable_mosaic.version = 11 : i64} {
  func.func @kernel(%arg0: i32, %arg1: memref<1x2x4x8x128xf32, #tpu.memory_space<vmem>>, %arg2: memref<1x4x4x32x256xf32, #tpu.memory_space<vmem>>) attributes {dimension_semantics = [#tpu.dimension_semantics<parallel>], iteration_bounds = array<i64: 3>, scalar_prefetch = 0 : i64, scratch_operands = 0 : i64, tpu.core_type = #tpu.core_type<tc>, window_params = [{pipeline_mode = #tpu.pipeline_mode<synchronous>, transform_indices = @transform_0, window_bounds = array<i64: 1, 2, 4, 8, 128>}, {transform_indices = @transform_1, window_bounds = array<i64: 1, 4, 4, 32, 256>}]} {
    %c0 = arith.constant 0 : index
    %c0_0 = arith.constant 0 : index
    %c0_1 = arith.constant 0 : index
    %c0_2 = arith.constant 0 : index
    %c0_3 = arith.constant 0 : index
    %0 = vector.load %arg1[%c0, %c0_0, %c0_1, %c0_2, %c0_3] : memref<1x2x4x8x128xf32, #tpu.memory_space<vmem>>, vector<1x2x4x8x128xf32>
    %c0_4 = arith.constant 0 : index
    %c0_5 = arith.constant 0 : index
    %c0_6 = arith.constant 0 : index
    %c0_7 = arith.constant 0 : index
    %c0_8 = arith.constant 0 : index
    %1 = vector.load %arg2[%c0_4, %c0_5, %c0_6, %c0_7, %c0_8] : memref<1x4x4x32x256xf32, #tpu.memory_space<vmem>>, vector<1x2x4x8x128xf32>
    tpu.vector_store %arg2[%c0_4, %c0_5, %c0_6, %c0_7, %c0_8], %0 {strides = array<i32>} : memref<1x4x4x32x256xf32, #tpu.memory_space<vmem>>, vector<1x2x4x8x128xf32>,
    %c0_9 = arith.constant 0 : index
    %c0_10 = arith.constant 0 : index
    %c0_11 = arith.constant 0 : index
    %c0_12 = arith.constant 0 : index
    %c128 = arith.constant 128 : index
    %2 = vector.load %arg2[%c0_9, %c0_10, %c0_11, %c0_12, %c128] : memref<1x4x4x32x256xf32, #tpu.memory_space<vmem>>, vector<1x2x4x8x128xf32>
    tpu.vector_store %arg2[%c0_9, %c0_10, %c0_11, %c0_12, %c128], %0 {strides = array<i32>} : memref<1x4x4x32x256xf32, #tpu.memory_space<vmem>>, vector<1x2x4x8x128xf32>,
    %c0_13 = arith.constant 0 : index
    %c0_14 = arith.constant 0 : index
    %c0_15 = arith.constant 0 : index
    %c8 = arith.constant 8 : index
    %c0_16 = arith.constant 0 : index
    %3 = vector.load %arg2[%c0_13, %c0_14, %c0_15, %c8, %c0_16] : memref<1x4x4x32x256xf32, #tpu.memory_space<vmem>>, vector<1x2x4x8x128xf32>
    tpu.vector_store %arg2[%c0_13, %c0_14, %c0_15, %c8, %c0_16], %0 {strides = array<i32>} : memref<1x4x4x32x256xf32, #tpu.memory_space<vmem>>, vector<1x2x4x8x128xf32>,
    %c0_17 = arith.constant 0 : index
    %c0_18 = arith.constant 0 : index
    %c0_19 = arith.constant 0 : index
    %c8_20 = arith.constant 8 : index
    %c128_21 = arith.constant 128 : index
    %4 = vector.load %arg2[%c0_17, %c0_18, %c0_19, %c8_20, %c128_21] : memref<1x4x4x32x256xf32, #tpu.memory_space<vmem>>, vector<1x2x4x8x128xf32>
    tpu.vector_store %arg2[%c0_17, %c0_18, %c0_19, %c8_20, %c128_21], %0 {strides = array<i32>} : memref<1x4x4x32x256xf32, #tpu.memory_space<vmem>>, vector<1x2x4x8x128xf32>,
    %c0_22 = arith.constant 0 : index
    %c0_23 = arith.constant 0 : index
    %c0_24 = arith.constant 0 : index
    %c16 = arith.constant 16 : index
    %c0_25 = arith.constant 0 : index
    %5 = vector.load %arg2[%c0_22, %c0_23, %c0_24, %c16, %c0_25] : memref<1x4x4x32x256xf32, #tpu.memory_space<vmem>>, vector<1x2x4x8x128xf32>
    tpu.vector_store %arg2[%c0_22, %c0_23, %c0_24, %c16, %c0_25], %0 {strides = array<i32>} : memref<1x4x4x32x256xf32, #tpu.memory_space<vmem>>, vector<1x2x4x8x128xf32>,
    %c0_26 = arith.constant 0 : index
    %c0_27 = arith.constant 0 : index
    %c0_28 = arith.constant 0 : index
    %c16_29 = arith.constant 16 : index
    %c128_30 = arith.constant 128 : index
    %6 = vector.load %arg2[%c0_26, %c0_27, %c0_28, %c16_29, %c128_30] : memref<1x4x4x32x256xf32, #tpu.memory_space<vmem>>, vector<1x2x4x8x128xf32>
    tpu.vector_store %arg2[%c0_26, %c0_27, %c0_28, %c16_29, %c128_30], %0 {strides = array<i32>} : memref<1x4x4x32x256xf32, #tpu.memory_space<vmem>>, vector<1x2x4x8x128xf32>,
    %c0_31 = arith.constant 0 : index
    %c0_32 = arith.constant 0 : index
    %c0_33 = arith.constant 0 : index
    %c24 = arith.constant 24 : index
    %c0_34 = arith.constant 0 : index
    %7 = vector.load %arg2[%c0_31, %c0_32, %c0_33, %c24, %c0_34] : memref<1x4x4x32x256xf32, #tpu.memory_space<vmem>>, vector<1x2x4x8x128xf32>
    tpu.vector_store %arg2[%c0_31, %c0_32, %c0_33, %c24, %c0_34], %0 {strides = array<i32>} : memref<1x4x4x32x256xf32, #tpu.memory_space<vmem>>, vector<1x2x4x8x128xf32>,
    %c0_35 = arith.constant 0 : index
    %c0_36 = arith.constant 0 : index
    %c0_37 = arith.constant 0 : index
    %c24_38 = arith.constant 24 : index
    %c128_39 = arith.constant 128 : index
    %8 = vector.load %arg2[%c0_35, %c0_36, %c0_37, %c24_38, %c128_39] : memref<1x4x4x32x256xf32, #tpu.memory_space<vmem>>, vector<1x2x4x8x128xf32>
    tpu.vector_store %arg2[%c0_35, %c0_36, %c0_37, %c24_38, %c128_39], %0 {strides = array<i32>} : memref<1x4x4x32x256xf32, #tpu.memory_space<vmem>>, vector<1x2x4x8x128xf32>,
    %c0_40 = arith.constant 0 : index
    %c2 = arith.constant 2 : index
    %c0_41 = arith.constant 0 : index
    %c0_42 = arith.constant 0 : index
    %c0_43 = arith.constant 0 : index
    %9 = vector.load %arg2[%c0_40, %c2, %c0_41, %c0_42, %c0_43] : memref<1x4x4x32x256xf32, #tpu.memory_space<vmem>>, vector<1x2x4x8x128xf32>
    tpu.vector_store %arg2[%c0_40, %c2, %c0_41, %c0_42, %c0_43], %0 {strides = array<i32>} : memref<1x4x4x32x256xf32, #tpu.memory_space<vmem>>, vector<1x2x4x8x128xf32>,
    %c0_44 = arith.constant 0 : index
    %c2_45 = arith.constant 2 : index
    %c0_46 = arith.constant 0 : index
    %c0_47 = arith.constant 0 : index
    %c128_48 = arith.constant 128 : index
    %10 = vector.load %arg2[%c0_44, %c2_45, %c0_46, %c0_47, %c128_48] : memref<1x4x4x32x256xf32, #tpu.memory_space<vmem>>, vector<1x2x4x8x128xf32>
    tpu.vector_store %arg2[%c0_44, %c2_45, %c0_46, %c0_47, %c128_48], %0 {strides = array<i32>} : memref<1x4x4x32x256xf32, #tpu.memory_space<vmem>>, vector<1x2x4x8x128xf32>,
    %c0_49 = arith.constant 0 : index
    %c2_50 = arith.constant 2 : index
    %c0_51 = arith.constant 0 : index
    %c8_52 = arith.constant 8 : index
    %c0_53 = arith.constant 0 : index
    %11 = vector.load %arg2[%c0_49, %c2_50, %c0_51, %c8_52, %c0_53] : memref<1x4x4x32x256xf32, #tpu.memory_space<vmem>>, vector<1x2x4x8x128xf32>
    tpu.vector_store %arg2[%c0_49, %c2_50, %c0_51, %c8_52, %c0_53], %0 {strides = array<i32>} : memref<1x4x4x32x256xf32, #tpu.memory_space<vmem>>, vector<1x2x4x8x128xf32>,
    %c0_54 = arith.constant 0 : index
    %c2_55 = arith.constant 2 : index
    %c0_56 = arith.constant 0 : index
    %c8_57 = arith.constant 8 : index
    %c128_58 = arith.constant 128 : index
    %12 = vector.load %arg2[%c0_54, %c2_55, %c0_56, %c8_57, %c128_58] : memref<1x4x4x32x256xf32, #tpu.memory_space<vmem>>, vector<1x2x4x8x128xf32>
    tpu.vector_store %arg2[%c0_54, %c2_55, %c0_56, %c8_57, %c128_58], %0 {strides = array<i32>} : memref<1x4x4x32x256xf32, #tpu.memory_space<vmem>>, vector<1x2x4x8x128xf32>,
    %c0_59 = arith.constant 0 : index
    %c2_60 = arith.constant 2 : index
    %c0_61 = arith.constant 0 : index
    %c16_62 = arith.constant 16 : index
    %c0_63 = arith.constant 0 : index
    %13 = vector.load %arg2[%c0_59, %c2_60, %c0_61, %c16_62, %c0_63] : memref<1x4x4x32x256xf32, #tpu.memory_space<vmem>>, vector<1x2x4x8x128xf32>
    tpu.vector_store %arg2[%c0_59, %c2_60, %c0_61, %c16_62, %c0_63], %0 {strides = array<i32>} : memref<1x4x4x32x256xf32, #tpu.memory_space<vmem>>, vector<1x2x4x8x128xf32>,
    %c0_64 = arith.constant 0 : index
    %c2_65 = arith.constant 2 : index
    %c0_66 = arith.constant 0 : index
    %c16_67 = arith.constant 16 : index
    %c128_68 = arith.constant 128 : index
    %14 = vector.load %arg2[%c0_64, %c2_65, %c0_66, %c16_67, %c128_68] : memref<1x4x4x32x256xf32, #tpu.memory_space<vmem>>, vector<1x2x4x8x128xf32>
    tpu.vector_store %arg2[%c0_64, %c2_65, %c0_66, %c16_67, %c128_68], %0 {strides = array<i32>} : memref<1x4x4x32x256xf32, #tpu.memory_space<vmem>>, vector<1x2x4x8x128xf32>,
    %c0_69 = arith.constant 0 : index
    %c2_70 = arith.constant 2 : index
    %c0_71 = arith.constant 0 : index
    %c24_72 = arith.constant 24 : index
    %c0_73 = arith.constant 0 : index
    %15 = vector.load %arg2[%c0_69, %c2_70, %c0_71, %c24_72, %c0_73] : memref<1x4x4x32x256xf32, #tpu.memory_space<vmem>>, vector<1x2x4x8x128xf32>
    tpu.vector_store %arg2[%c0_69, %c2_70, %c0_71, %c24_72, %c0_73], %0 {strides = array<i32>} : memref<1x4x4x32x256xf32, #tpu.memory_space<vmem>>, vector<1x2x4x8x128xf32>,
    %c0_74 = arith.constant 0 : index
    %c2_75 = arith.constant 2 : index
    %c0_76 = arith.constant 0 : index
    %c24_77 = arith.constant 24 : index
    %c128_78 = arith.constant 128 : index
    %16 = vector.load %arg2[%c0_74, %c2_75, %c0_76, %c24_77, %c128_78] : memref<1x4x4x32x256xf32, #tpu.memory_space<vmem>>, vector<1x2x4x8x128xf32>
    tpu.vector_store %arg2[%c0_74, %c2_75, %c0_76, %c24_77, %c128_78], %0 {strides = array<i32>} : memref<1x4x4x32x256xf32, #tpu.memory_space<vmem>>, vector<1x2x4x8x128xf32>,
    return
  }
  func.func @transform_0(%arg0: i32) -> (i32, i32, i32, i32, i32) {
    %c0_i32 = arith.constant 0 : i32
    %c0_i32_0 = arith.constant 0 : i32
    %c0_i32_1 = arith.constant 0 : i32
    %c0_i32_2 = arith.constant 0 : i32
    %c0_i32_3 = arith.constant 0 : i32
    %c0_i32_4 = arith.constant 0 : i32
    return %c0_i32, %c0_i32_0, %c0_i32_1, %c0_i32_2, %c0_i32_3 : i32, i32, i32, i32, i32
  }
  func.func @transform_1(%arg0: i32) -> (i32, i32, i32, i32, i32) {
    %c1_i32 = arith.constant 1 : i32
    %0 = arith.muli %arg0, %c1_i32 : i32
    %c0_i32 = arith.constant 0 : i32
    %1 = arith.addi %0, %c0_i32 : i32
    %c0_i32_0 = arith.constant 0 : i32
    %c0_i32_1 = arith.constant 0 : i32
    %c0_i32_2 = arith.constant 0 : i32
    %c0_i32_3 = arith.constant 0 : i32
    %c0_i32_4 = arith.constant 0 : i32
    return %1, %c0_i32_0, %c0_i32_1, %c0_i32_2, %c0_i32_3 : i32, i32, i32, i32, i32
  }
}

</mosaic_0001>

<llo_original>
// kernel: tpu_custom_call.1
$region0: #{tpu_custom_call.1}
  #allocation0 [shape = 'u32[]', space=smem, size = 0x4, offset = 0x4, fixed_abs, tag = 'smem constant byte address 0x4 - core index']
  #allocation1 [shape = 'u32[144,128]{1,0:T(1,128)}', space=vmem, size = 0x12000, scoped, tag = 'internal scratch']
  %s0 = inlined_call_operand.hbm [shape: f32[1,2,4,8,128], index: 0, kind: input, shape index: {}]
  %s1 = inlined_call_operand.hbm [shape: f32[3,4,4,32,256], index: 1, kind: output, shape index: {}]
  %s2 = sld [smem:[#allocation0]]
  $region41: #{tpu_custom_call.1} parent=0
    _
  %s4 = ssub.s32 1, %s2
  %s5 = scalar_select 0, %s4, %s2
  $region1: #{tpu_custom_call.1} parent=0
    #allocation2 [shape = 'u8[32768]{0}', space=vmem, size = 0x8000, scoped, tag = 'input window, operand 0, single buffered']
    #allocation3 [shape = 's32[2]{0}', space=sflag, size = 0x8, scoped, tag = 'scoped memory for tpu_custom_call.1']
    #allocation4 [shape = 's32[2]{0}', space=sflag, size = 0x8, scoped, tag = 'scoped memory for tpu_custom_call.1']
    #allocation5 [shape = 'u8[1048576]{0}', space=vmem, size = 0x100000, scoped, tag = 'output window, operand 0']
    %6 = vsyncpa [#allocation3], 0
    %7 = vsyncpa [#allocation4], 0
    %s8 = scalar_lea.sflag [#allocation4], 1
    %9 = vsyncpa %s8, 0
    loop: start=0, step=1, limit=5
    $region2: #{tpu_custom_call.1} parent=1 // loop_pre_header
      _
    $region3: #{tpu_custom_call.1} parent=1 // loop_header
      %s11 = sphi 0, %s15
      %p12 = scmp.ge.s32.totalorder %s11, 5
      %s19 = sphi 0, %s19
      %s21 = sphi 0, %s19
      %s22 = sphi 0, %s21
      %s36 = sphi 0, %s22
      %s42 = sphi 0, %s44
      %s45 = sphi 0, %s42
      %s46 = sphi 0, %s45
      %s62 = sphi 0, %s46
    $region4: #{tpu_custom_call.1} parent=1 // loop_header_branch
      %14 = sbr.rel (%p12) target = $region8
    $region5: #{tpu_custom_call.1} parent=1 // loop_body
      %s16 = ssub.s32 %s11, 1
      %s17 = ssub.s32 %s11, 2
      %s18 = sadd.s32 %s11, 1
      %s20 = sadd.s32 %s19, 1
      %p23 = scmp.eq.s32.totalorder %s11, 2
      %p24 = scmp.ne.s32.totalorder %s19, %s21
      %p25 = scmp.eq.s32.totalorder %s11, 0
      %p26 = por %p24, %p25
      %p27 = scmp.ne.s32.totalorder %s19, %s21
      %p28 = scmp.eq.s32.totalorder %s16, 2
      %p29 = por %p27, %p28
      %p30 = scmp.ne.s32.totalorder %s21, %s22
      %p31 = scmp.eq.s32.totalorder %s16, 0
      %p32 = por %p30, %p31
      %p33 = scmp.ne.s32.totalorder %s21, %s22
      %p34 = scmp.eq.s32.totalorder %s17, 2
      %p35 = por %p33, %p34
      %p37 = scmp.ne.s32.totalorder %s22, %s36
      %p38 = scmp.eq.s32.totalorder %s17, 0
      %p39 = por %p37, %p38
      %s40 = ssub.s32 %s11, %s18
      %p41 = scmp.eq.s32.totalorder %s40, 0
      %s43 = sadd.s32 %s42, 1
      %s44 = scalar_select %p41, %s42, %s43
      %p47 = pneg %p41
      %p48 = scmp.eq.s32.totalorder %s11, 2
      %p49 = por %p47, %p48
      %p50 = scmp.ne.s32.totalorder %s42, %s45
      %p51 = scmp.eq.s32.totalorder %s11, 0
      %p52 = por %p50, %p51
      %p53 = scmp.ne.s32.totalorder %s42, %s45
      %p54 = scmp.eq.s32.totalorder %s16, 2
      %p55 = por %p53, %p54
      %p56 = scmp.ne.s32.totalorder %s45, %s46
      %p57 = scmp.eq.s32.totalorder %s16, 0
      %p58 = por %p56, %p57
      %p59 = scmp.ne.s32.totalorder %s45, %s46
      %p60 = scmp.eq.s32.totalorder %s17, 2
      %p61 = por %p59, %p60
      %p63 = scmp.ne.s32.totalorder %s46, %s62
      %p64 = scmp.eq.s32.totalorder %s17, 0
      %p65 = por %p63, %p64
      %p66 = scmp.le.s32.totalorder 1, %s11
      %p67 = scmp.lt.s32.totalorder %s11, 4
      %p68 = pnand %p66, %p67
      %p69 = pneg %p68
      // Predicated region
      $region9: #{tpu_custom_call.1} parent=5 // pred_check
        _
      $region10: #{tpu_custom_call.1} parent=5 // pred_check_branch
        %71 = sbr.rel (%p68) target = $region12
      $region11: #{tpu_custom_call.1} parent=5 // pred_region
        %s72 = ssub.s32 %s11, 1
        // Predicated region
        $region13: #{tpu_custom_call.1} parent=11 // pred_check
          %p73 = pneg %p32
        $region14: #{tpu_custom_call.1} parent=11 // pred_check_branch
          %75 = sbr.rel (%p73) target = $region16
        $region15: #{tpu_custom_call.1} parent=11 // pred_region
          %s77 = ssub.s32 1024, 1024
          %78 = vsyncadd [#allocation3], %s77
          %s79 = sshll.u32 [#allocation2], 4
          %s80 = int_to_ptr.vmem [resolvable:$true] %s79
          %85 = dma.hbm_to_vmem [thread:$0]  %s0, 1024, %s80, [#allocation3], 128, 128, 8
        $region16: #{tpu_custom_call.1} parent=11 // pred_fallthru
          _
      $region12: #{tpu_custom_call.1} parent=5 // pred_fallthru
        _
      %p86 = scmp.lt.s32.totalorder %s11, 3
      // Predicated region
      $region17: #{tpu_custom_call.1} parent=5 // pred_check
        %p87 = pneg %p86
      $region18: #{tpu_custom_call.1} parent=5 // pred_check_branch
        %89 = sbr.rel (%p87) target = $region20
      $region19: #{tpu_custom_call.1} parent=5 // pred_region
        _
      $region20: #{tpu_custom_call.1} parent=5 // pred_fallthru
        _
      %p90 = scmp.le.s32.totalorder 1, %s11
      %p91 = scmp.lt.s32.totalorder %s11, 4
      %p92 = pnand %p90, %p91
      %p93 = pneg %p92
      // Predicated region
      $region21: #{tpu_custom_call.1} parent=5 // pred_check
        _
      $region22: #{tpu_custom_call.1} parent=5 // pred_check_branch
        %95 = sbr.rel (%p92) target = $region24
      $region23: #{tpu_custom_call.1} parent=5 // pred_region
        %s96 = ssub.s32 %s11, 1
        // Predicated region
        $region25: #{tpu_custom_call.1} parent=23 // pred_check
          %p97 = pneg %p32
        $region26: #{tpu_custom_call.1} parent=23 // pred_check_branch
          %99 = sbr.rel (%p97) target = $region28
        $region27: #{tpu_custom_call.1} parent=23 // pred_region
          %100 = dma.done [#allocation3], 1024
        $region28: #{tpu_custom_call.1} parent=23 // pred_fallthru
          _
        %p101 = pneg %p32
        %p102 = pneg %p29
        %p103 = pneg %p58
        %p104 = pneg %p55
        %s105 = sand.u32 %s45, 1
        %s106 = scalar_lea.sflag [#allocation4], %s105
        %s107 = sand.u32 %s45, 1
        %s108 = smul.addr %s107, 1024
        %s109 = scalar_lea.vmem [#allocation5], %s108
        %v110 = vld [vmem:[#allocation2] sm:$0xff]
        %v111 = vld [vmem:[#allocation2 + $0x8] sm:$0xff]
        %v112 = vld [vmem:[#allocation2 + $0x10] sm:$0xff]
        %v113 = vld [vmem:[#allocation2 + $0x18] sm:$0xff]
        %v114 = vld [vmem:[#allocation2 + $0x20] sm:$0xff]
        %v115 = vld [vmem:[#allocation2 + $0x28] sm:$0xff]
        %v116 = vld [vmem:[#allocation2 + $0x30] sm:$0xff]
        %v117 = vld [vmem:[#allocation2 + $0x38] sm:$0xff]
        %118 = vst [vmem:[%s109] sm:$0xff] %v110
        %119 = vst [vmem:[%s109 + $0x40] sm:$0xff] %v111
        %120 = vst [vmem:[%s109 + $0x80] sm:$0xff] %v112
        %121 = vst [vmem:[%s109 + $0xc0] sm:$0xff] %v113
        %122 = vst [vmem:[%s109 + $0x100] sm:$0xff] %v114
        %123 = vst [vmem:[%s109 + $0x140] sm:$0xff] %v115
        %124 = vst [vmem:[%s109 + $0x180] sm:$0xff] %v116
        %125 = vst [vmem:[%s109 + $0x1c0] sm:$0xff] %v117
        %126 = vst [vmem:[%s109 + $0x8] sm:$0xff] %v110
        %127 = vst [vmem:[%s109 + $0x48] sm:$0xff] %v111
        %128 = vst [vmem:[%s109 + $0x88] sm:$0xff] %v112
        %129 = vst [vmem:[%s109 + $0xc8] sm:$0xff] %v113
        %130 = vst [vmem:[%s109 + $0x108] sm:$0xff] %v114
        %131 = vst [vmem:[%s109 + $0x148] sm:$0xff] %v115
        %132 = vst [vmem:[%s109 + $0x188] sm:$0xff] %v116
        %133 = vst [vmem:[%s109 + $0x1c8] sm:$0xff] %v117
        %134 = vst [vmem:[%s109 + $0x10] sm:$0xff] %v110
        %135 = vst [vmem:[%s109 + $0x50] sm:$0xff] %v111
        %136 = vst [vmem:[%s109 + $0x90] sm:$0xff] %v112
        %137 = vst [vmem:[%s109 + $0xd0] sm:$0xff] %v113
        %138 = vst [vmem:[%s109 + $0x110] sm:$0xff] %v114
        %139 = vst [vmem:[%s109 + $0x150] sm:$0xff] %v115
        %140 = vst [vmem:[%s109 + $0x190] sm:$0xff] %v116
        %141 = vst [vmem:[%s109 + $0x1d0] sm:$0xff] %v117
        %142 = vst [vmem:[%s109 + $0x18] sm:$0xff] %v110
        %143 = vst [vmem:[%s109 + $0x58] sm:$0xff] %v111
        %144 = vst [vmem:[%s109 + $0x98] sm:$0xff] %v112
        %145 = vst [vmem:[%s109 + $0xd8] sm:$0xff] %v113
        %146 = vst [vmem:[%s109 + $0x118] sm:$0xff] %v114
        %147 = vst [vmem:[%s109 + $0x158] sm:$0xff] %v115
        %148 = vst [vmem:[%s109 + $0x198] sm:$0xff] %v116
        %149 = vst [vmem:[%s109 + $0x1d8] sm:$0xff] %v117
        %150 = vst [vmem:[%s109 + $0x20] sm:$0xff] %v110
        %151 = vst [vmem:[%s109 + $0x60] sm:$0xff] %v111
        %152 = vst [vmem:[%s109 + $0xa0] sm:$0xff] %v112
        %153 = vst [vmem:[%s109 + $0xe0] sm:$0xff] %v113
        %154 = vst [vmem:[%s109 + $0x120] sm:$0xff] %v114
        %155 = vst [vmem:[%s109 + $0x160] sm:$0xff] %v115
        %156 = vst [vmem:[%s109 + $0x1a0] sm:$0xff] %v116
        %157 = vst [vmem:[%s109 + $0x1e0] sm:$0xff] %v117
        %158 = vst [vmem:[%s109 + $0x28] sm:$0xff] %v110
        %159 = vst [vmem:[%s109 + $0x68] sm:$0xff] %v111
        %160 = vst [vmem:[%s109 + $0xa8] sm:$0xff] %v112
        %161 = vst [vmem:[%s109 + $0xe8] sm:$0xff] %v113
        %162 = vst [vmem:[%s109 + $0x128] sm:$0xff] %v114
        %163 = vst [vmem:[%s109 + $0x168] sm:$0xff] %v115
        %164 = vst [vmem:[%s109 + $0x1a8] sm:$0xff] %v116
        %165 = vst [vmem:[%s109 + $0x1e8] sm:$0xff] %v117
        %166 = vst [vmem:[%s109 + $0x30] sm:$0xff] %v110
        %167 = vst [vmem:[%s109 + $0x70] sm:$0xff] %v111
        %168 = vst [vmem:[%s109 + $0xb0] sm:$0xff] %v112
        %169 = vst [vmem:[%s109 + $0xf0] sm:$0xff] %v113
        %170 = vst [vmem:[%s109 + $0x130] sm:$0xff] %v114
        %171 = vst [vmem:[%s109 + $0x170] sm:$0xff] %v115
        %172 = vst [vmem:[%s109 + $0x1b0] sm:$0xff] %v116
        %173 = vst [vmem:[%s109 + $0x1f0] sm:$0xff] %v117
        %174 = vst [vmem:[%s109 + $0x38] sm:$0xff] %v110
        %175 = vst [vmem:[%s109 + $0x78] sm:$0xff] %v111
        %176 = vst [vmem:[%s109 + $0xb8] sm:$0xff] %v112
        %177 = vst [vmem:[%s109 + $0xf8] sm:$0xff] %v113
        %178 = vst [vmem:[%s109 + $0x138] sm:$0xff] %v114
        %179 = vst [vmem:[%s109 + $0x178] sm:$0xff] %v115
        %180 = vst [vmem:[%s109 + $0x1b8] sm:$0xff] %v116
        %181 = vst [vmem:[%s109 + $0x1f8] sm:$0xff] %v117
        %s182 = scalar_lea.vmem %s109, 512 [#allocation5]
        %183 = vst [vmem:[%s182] sm:$0xff] %v110
        %184 = vst [vmem:[%s182 + $0x40] sm:$0xff] %v111
        %185 = vst [vmem:[%s182 + $0x80] sm:$0xff] %v112
        %186 = vst [vmem:[%s182 + $0xc0] sm:$0xff] %v113
        %187 = vst [vmem:[%s182 + $0x100] sm:$0xff] %v114
        %188 = vst [vmem:[%s182 + $0x140] sm:$0xff] %v115
        %189 = vst [vmem:[%s182 + $0x180] sm:$0xff] %v116
        %190 = vst [vmem:[%s182 + $0x1c0] sm:$0xff] %v117
        %191 = vst [vmem:[%s182 + $0x8] sm:$0xff] %v110
        %192 = vst [vmem:[%s182 + $0x48] sm:$0xff] %v111
        %193 = vst [vmem:[%s182 + $0x88] sm:$0xff] %v112
        %194 = vst [vmem:[%s182 + $0xc8] sm:$0xff] %v113
        %195 = vst [vmem:[%s182 + $0x108] sm:$0xff] %v114
        %196 = vst [vmem:[%s182 + $0x148] sm:$0xff] %v115
        %197 = vst [vmem:[%s182 + $0x188] sm:$0xff] %v116
        %198 = vst [vmem:[%s182 + $0x1c8] sm:$0xff] %v117
        %199 = vst [vmem:[%s182 + $0x10] sm:$0xff] %v110
        %200 = vst [vmem:[%s182 + $0x50] sm:$0xff] %v111
        %201 = vst [vmem:[%s182 + $0x90] sm:$0xff] %v112
        %202 = vst [vmem:[%s182 + $0xd0] sm:$0xff] %v113
        %203 = vst [vmem:[%s182 + $0x110] sm:$0xff] %v114
        %204 = vst [vmem:[%s182 + $0x150] sm:$0xff] %v115
        %205 = vst [vmem:[%s182 + $0x190] sm:$0xff] %v116
        %206 = vst [vmem:[%s182 + $0x1d0] sm:$0xff] %v117
        %207 = vst [vmem:[%s182 + $0x18] sm:$0xff] %v110
        %208 = vst [vmem:[%s182 + $0x58] sm:$0xff] %v111
        %209 = vst [vmem:[%s182 + $0x98] sm:$0xff] %v112
        %210 = vst [vmem:[%s182 + $0xd8] sm:$0xff] %v113
        %211 = vst [vmem:[%s182 + $0x118] sm:$0xff] %v114
        %212 = vst [vmem:[%s182 + $0x158] sm:$0xff] %v115
        %213 = vst [vmem:[%s182 + $0x198] sm:$0xff] %v116
        %214 = vst [vmem:[%s182 + $0x1d8] sm:$0xff] %v117
        %215 = vst [vmem:[%s182 + $0x20] sm:$0xff] %v110
        %216 = vst [vmem:[%s182 + $0x60] sm:$0xff] %v111
        %217 = vst [vmem:[%s182 + $0xa0] sm:$0xff] %v112
        %218 = vst [vmem:[%s182 + $0xe0] sm:$0xff] %v113
        %219 = vst [vmem:[%s182 + $0x120] sm:$0xff] %v114
        %220 = vst [vmem:[%s182 + $0x160] sm:$0xff] %v115
        %221 = vst [vmem:[%s182 + $0x1a0] sm:$0xff] %v116
        %222 = vst [vmem:[%s182 + $0x1e0] sm:$0xff] %v117
        %223 = vst [vmem:[%s182 + $0x28] sm:$0xff] %v110
        %224 = vst [vmem:[%s182 + $0x68] sm:$0xff] %v111
        %225 = vst [vmem:[%s182 + $0xa8] sm:$0xff] %v112
        %226 = vst [vmem:[%s182 + $0xe8] sm:$0xff] %v113
        %227 = vst [vmem:[%s182 + $0x128] sm:$0xff] %v114
        %228 = vst [vmem:[%s182 + $0x168] sm:$0xff] %v115
        %229 = vst [vmem:[%s182 + $0x1a8] sm:$0xff] %v116
        %230 = vst [vmem:[%s182 + $0x1e8] sm:$0xff] %v117
        %231 = vst [vmem:[%s182 + $0x30] sm:$0xff] %v110
        %232 = vst [vmem:[%s182 + $0x70] sm:$0xff] %v111
        %233 = vst [vmem:[%s182 + $0xb0] sm:$0xff] %v112
        %234 = vst [vmem:[%s182 + $0xf0] sm:$0xff] %v113
        %235 = vst [vmem:[%s182 + $0x130] sm:$0xff] %v114
        %236 = vst [vmem:[%s182 + $0x170] sm:$0xff] %v115
        %237 = vst [vmem:[%s182 + $0x1b0] sm:$0xff] %v116
        %238 = vst [vmem:[%s182 + $0x1f0] sm:$0xff] %v117
        %239 = vst [vmem:[%s182 + $0x38] sm:$0xff] %v110
        %240 = vst [vmem:[%s182 + $0x78] sm:$0xff] %v111
        %241 = vst [vmem:[%s182 + $0xb8] sm:$0xff] %v112
        %242 = vst [vmem:[%s182 + $0xf8] sm:$0xff] %v113
        %243 = vst [vmem:[%s182 + $0x138] sm:$0xff] %v114
        %244 = vst [vmem:[%s182 + $0x178] sm:$0xff] %v115
        %245 = vst [vmem:[%s182 + $0x1b8] sm:$0xff] %v116
        %246 = vst [vmem:[%s182 + $0x1f8] sm:$0xff] %v117
        %s247 = sand.u32 %s45, 1
        %s248 = scalar_lea.sflag [#allocation4], %s247
        %s249 = sand.u32 %s45, 1
        %s250 = smul.addr %s249, 1024
        %s251 = scalar_lea.vmem [#allocation5], %s250
        // Predicated region
        $region29: #{tpu_custom_call.1} parent=23 // pred_check
          %p252 = pneg %p55
        $region30: #{tpu_custom_call.1} parent=23 // pred_check_branch
          %254 = sbr.rel (%p252) target = $region32
        $region31: #{tpu_custom_call.1} parent=23 // pred_region
          %s256 = ssub.s32 16384, 16384
          %257 = vsyncadd %s248, %s256
          %s258 = smul.addr %s16, 128
          %s259 = smul.addr %s258, 128
          %s260 = scalar_lea.hbm %s1, %s259
          %s261 = sshll.u32 %s251, 4
          %s262 = int_to_ptr.vmem [resolvable:$true] %s261
          %267 = dma.vmem_to_hbm [thread:$0]  %s262, 16384, %s260, %s248, 256, 256, 16
        $region32: #{tpu_custom_call.1} parent=23 // pred_fallthru
          _
      $region24: #{tpu_custom_call.1} parent=5 // pred_fallthru
        _
      %p268 = scmp.le.s32.totalorder 2, %s11
      // Predicated region
      $region33: #{tpu_custom_call.1} parent=5 // pred_check
        %p269 = pneg %p268
      $region34: #{tpu_custom_call.1} parent=5 // pred_check_branch
        %271 = sbr.rel (%p269) target = $region36
      $region35: #{tpu_custom_call.1} parent=5 // pred_region
        %s272 = ssub.s32 %s11, 2
        // Predicated region
        $region37: #{tpu_custom_call.1} parent=35 // pred_check
          %p273 = pneg %p61
        $region38: #{tpu_custom_call.1} parent=35 // pred_check_branch
          %275 = sbr.rel (%p273) target = $region40
        $region39: #{tpu_custom_call.1} parent=35 // pred_region
          %s276 = sand.u32 %s46, 1
          %s277 = scalar_lea.sflag [#allocation4], %s276
          %s278 = sand.u32 %s46, 1
          %s279 = smul.addr %s278, 1024
          %s280 = scalar_lea.vmem [#allocation5], %s279
          %281 = dma.done %s277, 16384
        $region40: #{tpu_custom_call.1} parent=35 // pred_fallthru
          _
      $region36: #{tpu_custom_call.1} parent=5 // pred_fallthru
        _
    $region6: #{tpu_custom_call.1} parent=1 // loop_footer
      %s15 = sadd.s32 1, %s11
    $region7: #{tpu_custom_call.1} parent=1 // loop_footer_branch
      %10 = sbr.rel target = $region3
    $region8: #{tpu_custom_call.1} parent=1 // loop_exit
      _
    %282 = vsyncpa [#allocation3], 1
    %s283 = scalar_lea.sflag [#allocation3], 1
    %284 = vsyncpa %s283, 1
    %285 = vsyncpa [#allocation4], 1
    %s286 = scalar_lea.sflag [#allocation4], 1
    %287 = vsyncpa %s286, 1

</llo_original>
